<compile_context>
chip_gen: v6e
topology: v6e:2x2x1
jax: 0.10.0
libtpu: 0.0.40
codegen_flags: <defaults>
</compile_context>

<pallas_src>
import functools

import jax
import jax.numpy as jnp
from jax.experimental import pallas as pl
from jax.experimental.pallas import tpu as pltpu

# Module hyper-parameters from RegionLoss.__init__
COORD_SCALE = 1.0
NOOBJECT_SCALE = 1.0
OBJECT_SCALE = 5.0
CLASS_SCALE = 1.0
THRESH = 0.6
SEEN = 0


def _choose_row_tile(R):
    # Rows (nB*nA) per grid step: multiple of 8.  Small problems run a single
    # fused step (per-step overhead dominates otherwise); large problems use
    # 256-row tiles, which keep the ~12 f32 planes per step well inside every
    # generation's VMEM (incl. v7x's 64 MiB).
    r8 = ((R + 7) // 8) * 8
    return r8 if r8 <= 512 else 256


def _mosaic_params(block_bytes):
    # Explicit scoped-VMEM limit: double-buffered blocks + headroom, clamped
    # below v7x's 64 MiB physical VMEM.
    vmem = int(min(max(4 * block_bytes, 32 * 1024 * 1024), 48 * 1024 * 1024))
    return pltpu.CompilerParams(dimension_semantics=("parallel",),
                                vmem_limit_bytes=vmem)


# --------------- Pallas kernel 1: activations + pred boxes ------------------
def _act_pred_kernel(box_ref, gx_ref, gy_ref, pred_ref, *,
                     anchor_w, anchor_h, nA, TR):
    x = jax.nn.sigmoid(box_ref[0])                    # (TR, S)
    y = jax.nn.sigmoid(box_ref[1])
    w = box_ref[2]
    h = box_ref[3]

    # Per-row anchor: row r uses anchors[r % nA].  Anchor values are
    # trace-time constants, so this is nA selects on a tiny (TR, 1) vector.
    r0 = pl.program_id(0) * TR
    a_idx = (jax.lax.broadcasted_iota(jnp.int32, (TR, 1), 0) + r0) % nA
    aw = jnp.zeros((TR, 1), jnp.float32)
    ah = jnp.zeros((TR, 1), jnp.float32)
    for a in range(nA):
        hit = a_idx == a
        aw = jnp.where(hit, jnp.float32(anchor_w[a]), aw)
        ah = jnp.where(hit, jnp.float32(anchor_h[a]), ah)

    pred_ref[0] = x + gx_ref[...]                     # (TR,S) + (1,S)
    pred_ref[1] = y + gy_ref[...]
    pred_ref[2] = jnp.exp(w) * aw                     # (TR,S) * (TR,1)
    pred_ref[3] = jnp.exp(h) * ah


def _act_pred_call(box4, gx_row, gy_row, anchor_w, anchor_h, nA, TR):
    _, R_pad, S = box4.shape
    n_tiles = R_pad // TR
    block_bytes = 4 * (4 * TR * S + 2 * S + 4 * TR * S)
    return pl.pallas_call(
        functools.partial(_act_pred_kernel, anchor_w=anchor_w,
                          anchor_h=anchor_h, nA=nA, TR=TR),
        grid=(n_tiles,),
        in_specs=[
            pl.BlockSpec((4, TR, S), lambda i: (0, i, 0)),   # x,y,w,h planes
            pl.BlockSpec((1, S), lambda i: (0, 0)),          # grid_x row
            pl.BlockSpec((1, S), lambda i: (0, 0)),          # grid_y row
        ],
        out_specs=pl.BlockSpec((4, TR, S), lambda i: (0, i, 0)),
        out_shape=jax.ShapeDtypeStruct((4, R_pad, S), jnp.float32),
        compiler_params=_mosaic_params(block_bytes),
    )(box4, gx_row, gy_row)


# --------------- Pallas kernel 2: masked box/conf losses --------------------
def _loss_kernel(box_ref, conf_ref, aux_ref, o_ref):
    x = jax.nn.sigmoid(box_ref[0])
    y = jax.nn.sigmoid(box_ref[1])
    w = box_ref[2]
    h = box_ref[3]
    conf = jax.nn.sigmoid(conf_ref[0])

    tx, ty = aux_ref[0], aux_ref[1]
    tw, th = aux_ref[2], aux_ref[3]
    tconf = aux_ref[4]
    coord_mask = aux_ref[5]
    conf_mask = aux_ref[6]

    # sum(((a - t) * m)^2) / 2 == reference MSE(a*m, t*m) / 2 exactly
    # (the reference multiplies both operands by the mask, squaring it too).
    def mse_half(a, t, m):
        d = (a - t) * m
        return 0.5 * jnp.sum(d * d)

    loss_x = COORD_SCALE * mse_half(x, tx, coord_mask)
    loss_y = COORD_SCALE * mse_half(y, ty, coord_mask)
    loss_w = COORD_SCALE * mse_half(w, tw, coord_mask)
    loss_h = COORD_SCALE * mse_half(h, th, coord_mask)

    # conf_mask here is pre-sqrt: sum(m*(conf-tconf)^2)/2 == MSE(conf*sqrt(m),
    # tconf*sqrt(m))/2 of the reference.
    dconf = conf - tconf
    loss_conf = 0.5 * jnp.sum(conf_mask * dconf * dconf)

    total = loss_x + loss_y + loss_w + loss_h + loss_conf
    o_ref[...] = jnp.full(o_ref.shape, total, jnp.float32)   # lane-dense 128-row


def _loss_call(box4, conf1, aux, TR):
    _, R_pad, S = box4.shape
    n_tiles = R_pad // TR
    block_bytes = 4 * ((4 + 1 + 7) * TR * S + 128)
    out = pl.pallas_call(
        _loss_kernel,
        grid=(n_tiles,),
        in_specs=[
            pl.BlockSpec((4, TR, S), lambda i: (0, i, 0)),
            pl.BlockSpec((1, TR, S), lambda i: (0, i, 0)),
            pl.BlockSpec((7, TR, S), lambda i: (0, i, 0)),
        ],
        out_specs=pl.BlockSpec((1, 1, 128), lambda i: (i, 0, 0)),
        out_shape=jax.ShapeDtypeStruct((n_tiles, 1, 128), jnp.float32),
        compiler_params=_mosaic_params(block_bytes),
    )(box4, conf1, aux)
    return jnp.sum(out[:, 0, 0])


# ----------------- plain-JAX glue: build_targets + class CE -----------------
def _iou_components(b1x, b1y, b1w, b1h, b2x, b2y, b2w, b2h):
    # center-format IoU, matches yolo bbox_iou(x1y1x2y2=False).
    mx = jnp.minimum(b1x - b1w / 2.0, b2x - b2w / 2.0)
    Mx = jnp.maximum(b1x + b1w / 2.0, b2x + b2w / 2.0)
    my = jnp.minimum(b1y - b1h / 2.0, b2y - b2h / 2.0)
    My = jnp.maximum(b1y + b1h / 2.0, b2y + b2h / 2.0)
    uw = Mx - mx
    uh = My - my
    cw = b1w + b2w - uw
    ch = b1h + b2h - uh
    carea = jnp.where((cw > 0) & (ch > 0), cw * ch, 0.0)
    uarea = b1w * b1h + b2w * b2h - carea
    return carea / jnp.maximum(uarea, 1e-10)   # TODO(synk): ref has no clamp


def _build_targets_and_cls(px, py, pw, ph, out3, target, anchors,
                           nA, nC, nH, nW,
                           noobject_scale, object_scale, sil_thresh, seen):
    # TODO(synk): yolo_utils.LossUtils.build_targets is data-dependent
    # scatter/gather over GT boxes; implemented in plain JAX (not Pallas).
    nB = target.shape[0]
    maxT = target.shape[1] // 5
    anc = jnp.asarray(anchors, jnp.float32).reshape(nA, -1)
    aw = anc[:, 0]
    ah = anc[:, 1]

    tb = target.reshape(nB, maxT, 5)                      # [cls, x, y, w, h]
    valid = jnp.cumprod((tb[:, :, 1] != 0).astype(jnp.int32), axis=1) > 0

    gx_all = tb[:, :, 1] * nW
    gy_all = tb[:, :, 2] * nH
    gw_all = tb[:, :, 3] * nW
    gh_all = tb[:, :, 4] * nH

    S = nH * nW
    nAnchors = nA * S
    pxb = px.reshape(nB, nAnchors)
    pyb = py.reshape(nB, nAnchors)
    pwb = pw.reshape(nB, nAnchors)
    phb = ph.reshape(nB, nAnchors)

    ious = _iou_components(
        pxb[:, :, None], pyb[:, :, None], pwb[:, :, None], phb[:, :, None],
        gx_all[:, None, :], gy_all[:, None, :],
        gw_all[:, None, :], gh_all[:, None, :])
    ious = jnp.where(valid[:, None, :], ious, 0.0)
    cur_ious = jnp.max(ious, axis=2)                      # (nB, nAnchors)

    conf_mask = jnp.where(cur_ious > sil_thresh, 0.0,
                          jnp.float32(noobject_scale)).reshape(nB, nA, nH, nW)

    shp = (nB, nA, nH, nW)
    if seen < 12800:
        coord_mask = jnp.ones(shp, jnp.float32)
        tx = jnp.full(shp, 0.5, jnp.float32)
        ty = jnp.full(shp, 0.5, jnp.float32)
    else:
        coord_mask = jnp.zeros(shp, jnp.float32)
        tx = jnp.zeros(shp, jnp.float32)
        ty = jnp.zeros(shp, jnp.float32)
    tw = jnp.zeros(shp, jnp.float32)
    th = jnp.zeros(shp, jnp.float32)
    tconf = jnp.zeros(shp, jnp.float32)

    px4 = px.reshape(shp)
    py4 = py.reshape(shp)
    pw4 = pw.reshape(shp)
    ph4 = ph.reshape(shp)

    b_idx = jnp.arange(nB)

    # per-GT responsible anchor / cell (vectorized over (nB, maxT))
    gi_all = jnp.clip(gx_all.astype(jnp.int32), 0, nW - 1)
    gj_all = jnp.clip(gy_all.astype(jnp.int32), 0, nH - 1)
    an_iou = _iou_components(0.0, 0.0, gw_all[:, :, None], gh_all[:, :, None],
                             0.0, 0.0, aw[None, None, :], ah[None, None, :])
    best_n_all = jnp.argmax(an_iou, axis=2)               # (nB, maxT)
    best_aw = aw[best_n_all]
    best_ah = ah[best_n_all]

    pbx = px4[b_idx[:, None], best_n_all, gj_all, gi_all]
    pby = py4[b_idx[:, None], best_n_all, gj_all, gi_all]
    pbw = pw4[b_idx[:, None], best_n_all, gj_all, gi_all]
    pbh = ph4[b_idx[:, None], best_n_all, gj_all, gi_all]
    iou_pred_all = _iou_components(gx_all, gy_all, gw_all, gh_all,
                                   pbx, pby, pbw, pbh)

    # sequential scatter preserves the reference's last-write-wins semantics
    for t in range(maxT):
        v = valid[:, t]
        idx = (b_idx, best_n_all[:, t], gj_all[:, t], gi_all[:, t])

        def cset(arr, val, _idx=idx, _v=v):
            return arr.at[_idx].set(jnp.where(_v, val, arr[_idx]))

        coord_mask = cset(coord_mask, 1.0)
        conf_mask = cset(conf_mask, jnp.float32(object_scale))
        tx = cset(tx, gx_all[:, t] - gi_all[:, t].astype(jnp.float32))
        ty = cset(ty, gy_all[:, t] - gj_all[:, t].astype(jnp.float32))
        tw = cset(tw, jnp.log(jnp.maximum(gw_all[:, t], 1e-12) / best_aw[:, t]))
        th = cset(th, jnp.log(jnp.maximum(gh_all[:, t], 1e-12) / best_ah[:, t]))
        tconf = cset(tconf, iou_pred_all[:, t])

    # ---- class cross-entropy: gather logits at GT cells only (plain JAX) ---
    # The reference sums CE over cells with cls_mask == 1 using the final
    # (last-written) class.  Weight each GT by "is the last valid writer of
    # its cell" so duplicate cells are counted once with the correct class.
    cols = gj_all * nW + gi_all                            # spatial index
    cell_id = best_n_all * S + cols                        # (nB, maxT)
    tt = jnp.arange(maxT)
    later = tt[None, :] > tt[:, None]
    same = cell_id[:, :, None] == cell_id[:, None, :]
    dup_after = jnp.any(same & valid[:, None, :] & later[None, :, :], axis=2)
    owner = valid & jnp.logical_not(dup_after)             # (nB, maxT)

    rows = b_idx[:, None] * nA + best_n_all                # (nB, maxT)
    ch = 5 + jnp.arange(nC)
    logits_g = out3[rows[:, :, None], ch[None, None, :],
                    cols[:, :, None]].astype(jnp.float32)  # (nB, maxT, nC)
    cls_g = jnp.clip(tb[:, :, 0].astype(jnp.int32), 0, nC - 1)
    lse = jax.nn.logsumexp(logits_g, axis=-1)
    picked = jnp.take_along_axis(logits_g, cls_g[..., None], axis=-1)[..., 0]
    loss_cls = jnp.float32(CLASS_SCALE) * jnp.sum(
        jnp.where(owner, lse - picked, 0.0))

    return coord_mask, conf_mask, tx, ty, tw, th, tconf, loss_cls


# ------------------------------ forward pass --------------------------------
def region_loss_forward(output, target, *, anchors, num_anchors, num_classes):
    nB, C, nH, nW = output.shape
    nA, nC = num_anchors, num_classes
    assert C == nA * (5 + nC)
    R, S = nB * nA, nH * nW

    TR = _choose_row_tile(R)
    R_pad = ((R + TR - 1) // TR) * TR

    # [nB*nA, 5+nC, nH*nW] view of the raw activations (no copy).
    out3 = output.reshape(R, 5 + nC, S)

    # Channel-major slabs the kernels actually read (padded rows are zero, so
    # every masked term they produce vanishes).  Class planes stay in HBM.
    box4 = jnp.transpose(out3[:, :4, :], (1, 0, 2)).astype(jnp.float32)
    box4 = jnp.pad(box4, ((0, 0), (0, R_pad - R), (0, 0)))
    conf1 = jnp.transpose(out3[:, 4:5, :], (1, 0, 2)).astype(jnp.float32)
    conf1 = jnp.pad(conf1, ((0, 0), (0, R_pad - R), (0, 0)))

    # anchors are module hyper-parameters -> compile-time constants.
    anc = tuple(float(a) for a in anchors)
    step = len(anc) // nA
    # TODO(synk): anchor_step == 4 special-casing of the reference (seen<12800
    # per-anchor tx/ty targets) is not implemented; step >= 2 uses (w, h).
    anchor_w = tuple(anc[a * step] for a in range(nA))
    anchor_h = tuple(anc[a * step + 1] for a in range(nA))

    s = jnp.arange(S, dtype=jnp.int32)
    gx_row = (s % nW).astype(jnp.float32).reshape(1, S)
    gy_row = (s // nW).astype(jnp.float32).reshape(1, S)

    pred4 = _act_pred_call(box4, gx_row, gy_row, anchor_w, anchor_h, nA, TR)
    px, py, pw, ph = pred4[0, :R], pred4[1, :R], pred4[2, :R], pred4[3, :R]

    (coord_mask, conf_mask, tx, ty, tw, th, tconf, loss_cls) = \
        _build_targets_and_cls(px, py, pw, ph, out3, target, anc, nA, nC, nH,
                               nW, NOOBJECT_SCALE, OBJECT_SCALE, THRESH, SEEN)

    # TODO(synk): nProposals = (conf > 0.25).sum() is diagnostic-only in the
    # reference module (does not affect the returned loss); omitted.

    plane = lambda a: a.reshape(R, S)
    aux = jnp.stack([plane(tx), plane(ty), plane(tw), plane(th), plane(tconf),
                     plane(coord_mask), plane(conf_mask)],
                    axis=0).astype(jnp.float32)              # (7, R, S)
    aux = jnp.pad(aux, ((0, 0), (0, R_pad - R), (0, 0)))

    return _loss_call(box4, conf1, aux, TR) + loss_cls


# ---------------------------------- main -------------------------------------
if __name__ == "__main__":
    key = jax.random.PRNGKey(0)
    nB, nA, nC, nH, nW = 2, 5, 20, 16, 16
    anchors = (1.3221, 1.73145, 3.19275, 4.00944, 5.05587,
               8.09892, 9.47112, 4.84053, 11.2364, 10.0071)

    k1, _ = jax.random.split(key)
    output = 0.5 * jax.random.normal(k1, (nB, nA * (5 + nC), nH, nW),
                                     jnp.float32)

    # target layout: (nB, maxT*5) with rows [class, x, y, w, h] (normalized),
    # zero-padded after the valid boxes.
    maxT = 5
    target = jnp.zeros((nB, maxT * 5), jnp.float32)
    boxes = [
        [[6.0, 0.30, 0.40, 0.20, 0.30], [11.0, 0.70, 0.60, 0.15, 0.25]],
        [[2.0, 0.50, 0.50, 0.40, 0.35], [17.0, 0.20, 0.80, 0.10, 0.12]],
    ]
    for b in range(nB):
        for t, box in enumerate(boxes[b]):
            target = target.at[b, t * 5:(t + 1) * 5].set(
                jnp.asarray(box, jnp.float32))

    forward = jax.jit(functools.partial(region_loss_forward,
                                        anchors=anchors,
                                        num_anchors=nA, num_classes=nC))
    loss = jax.block_until_ready(forward(output, target))
    assert jnp.isfinite(loss)
    print("KERNEL_OK")
</pallas_src>

<mosaic_0001>
module attributes {stable_mosaic.version = 11 : i64} {
  func.func @_act_pred_kernel(%arg0: i32, %arg1: memref<4x16x256xf32, #tpu.memory_space<vmem>>, %arg2: memref<1x256xf32, #tpu.memory_space<vmem>>, %arg3: memref<1x256xf32, #tpu.memory_space<vmem>>, %arg4: memref<4x16x256xf32, #tpu.memory_space<vmem>>) attributes {dimension_semantics = [#tpu.dimension_semantics<parallel>], iteration_bounds = array<i64: 1>, scalar_prefetch = 0 : i64, scratch_operands = 0 : i64, tpu.core_type = #tpu.core_type<tc>, window_params = [{transform_indices = @transform_0, window_bounds = array<i64: 4, 16, 256>}, {pipeline_mode = #tpu.pipeline_mode<synchronous>, transform_indices = @transform_1, window_bounds = array<i64: 1, 256>}, {pipeline_mode = #tpu.pipeline_mode<synchronous>, transform_indices = @transform_2, window_bounds = array<i64: 1, 256>}, {transform_indices = @transform_3, window_bounds = array<i64: 4, 16, 256>}]} {
    %c0 = arith.constant 0 : index
    %c0_0 = arith.constant 0 : index
    %c0_1 = arith.constant 0 : index
    %0 = vector.load %arg1[%c0, %c0_0, %c0_1] : memref<4x16x256xf32, #tpu.memory_space<vmem>>, vector<1x16x256xf32>
    %1 = vector.shape_cast %0 : vector<1x16x256xf32> to vector<16x256xf32>
    %2 = arith.negf %1 : vector<16x256xf32>
    %3 = math.exp %2 : vector<16x256xf32>
    %cst = arith.constant 1.000000e+00 : f32
    %4 = vector.broadcast %cst : f32 to vector<16x256xf32>
    %5 = arith.addf %4, %3 : vector<16x256xf32>
    %6 = arith.divf %4, %5 : vector<16x256xf32>
    %c1 = arith.constant 1 : index
    %c0_2 = arith.constant 0 : index
    %c0_3 = arith.constant 0 : index
    %7 = vector.load %arg1[%c1, %c0_2, %c0_3] : memref<4x16x256xf32, #tpu.memory_space<vmem>>, vector<1x16x256xf32>
    %8 = vector.shape_cast %7 : vector<1x16x256xf32> to vector<16x256xf32>
    %9 = arith.negf %8 : vector<16x256xf32>
    %10 = math.exp %9 : vector<16x256xf32>
    %cst_4 = arith.constant 1.000000e+00 : f32
    %11 = vector.broadcast %cst_4 : f32 to vector<16x256xf32>
    %12 = arith.addf %11, %10 : vector<16x256xf32>
    %13 = arith.divf %11, %12 : vector<16x256xf32>
    %c2 = arith.constant 2 : index
    %c0_5 = arith.constant 0 : index
    %c0_6 = arith.constant 0 : index
    %14 = vector.load %arg1[%c2, %c0_5, %c0_6] : memref<4x16x256xf32, #tpu.memory_space<vmem>>, vector<1x16x256xf32>
    %15 = vector.shape_cast %14 : vector<1x16x256xf32> to vector<16x256xf32>
    %c3 = arith.constant 3 : index
    %c0_7 = arith.constant 0 : index
    %c0_8 = arith.constant 0 : index
    %16 = vector.load %arg1[%c3, %c0_7, %c0_8] : memref<4x16x256xf32, #tpu.memory_space<vmem>>, vector<1x16x256xf32>
    %17 = vector.shape_cast %16 : vector<1x16x256xf32> to vector<16x256xf32>
    %c16_i32 = arith.constant 16 : i32
    %18 = arith.muli %arg0, %c16_i32 : i32
    %19 = tpu.iota {dimensions = array<i32: 0>} : vector<16x1xi32>
    %20 = vector.broadcast %18 : i32 to vector<16x1xi32>
    %21 = arith.addi %19, %20 : vector<16x1xi32>
    %c5_i32 = arith.constant 5 : i32
    %c0_i32 = arith.constant 0 : i32
    %22 = arith.cmpi eq, %c5_i32, %c0_i32 : i32
    %c1_i32 = arith.constant 1 : i32
    %23 = arith.select %22, %c1_i32, %c5_i32 : i32
    %24 = vector.broadcast %23 : i32 to vector<16x1xi32>
    %25 = arith.remsi %21, %24 : vector<16x1xi32>
    %c0_i32_9 = arith.constant 0 : i32
    %26 = vector.broadcast %c0_i32_9 : i32 to vector<16x1xi32>
    %27 = arith.cmpi ne, %25, %26 : vector<16x1xi32>
    %c0_i32_10 = arith.constant 0 : i32
    %28 = vector.broadcast %c0_i32_10 : i32 to vector<16x1xi32>
    %29 = arith.cmpi slt, %25, %28 : vector<16x1xi32>
    %c0_i32_11 = arith.constant 0 : i32
    %30 = arith.cmpi slt, %23, %c0_i32_11 : i32
    %31 = vector.broadcast %30 : i1 to vector<16x1xi1>
    %32 = vector.broadcast %31 : vector<16x1xi1> to vector<16x1xi1>
    %33 = arith.xori %29, %32 : vector<16x1xi1>
    %34 = arith.andi %33, %27 : vector<16x1xi1>
    %35 = vector.broadcast %23 : i32 to vector<16x1xi32>
    %36 = arith.addi %25, %35 : vector<16x1xi32>
    %37 = arith.select %34, %36, %25 : vector<16x1xi1>, vector<16x1xi32>
    %cst_12 = arith.constant 0.000000e+00 : f32
    %38 = vector.broadcast %cst_12 : f32 to vector<16x1xf32>
    %cst_13 = arith.constant 0.000000e+00 : f32
    %39 = vector.broadcast %cst_13 : f32 to vector<16x1xf32>
    %c0_i32_14 = arith.constant 0 : i32
    %40 = vector.broadcast %c0_i32_14 : i32 to vector<16x1xi32>
    %41 = arith.cmpi eq, %37, %40 : vector<16x1xi32>
    %cst_15 = arith.constant 1.322100e+00 : f32
    %42 = vector.broadcast %cst_15 : f32 to vector<16x1xf32>
    %43 = arith.select %41, %42, %38 : vector<16x1xi1>, vector<16x1xf32>
    %cst_16 = arith.constant 1.731450e+00 : f32
    %44 = vector.broadcast %cst_16 : f32 to vector<16x1xf32>
    %45 = arith.select %41, %44, %39 : vector<16x1xi1>, vector<16x1xf32>
    %c1_i32_17 = arith.constant 1 : i32
    %46 = vector.broadcast %c1_i32_17 : i32 to vector<16x1xi32>
    %47 = arith.cmpi eq, %37, %46 : vector<16x1xi32>
    %cst_18 = arith.constant 3.192750e+00 : f32
    %48 = vector.broadcast %cst_18 : f32 to vector<16x1xf32>
    %49 = arith.select %47, %48, %43 : vector<16x1xi1>, vector<16x1xf32>
    %cst_19 = arith.constant 4.009440e+00 : f32
    %50 = vector.broadcast %cst_19 : f32 to vector<16x1xf32>
    %51 = arith.select %47, %50, %45 : vector<16x1xi1>, vector<16x1xf32>
    %c2_i32 = arith.constant 2 : i32
    %52 = vector.broadcast %c2_i32 : i32 to vector<16x1xi32>
    %53 = arith.cmpi eq, %37, %52 : vector<16x1xi32>
    %cst_20 = arith.constant 5.055870e+00 : f32
    %54 = vector.broadcast %cst_20 : f32 to vector<16x1xf32>
    %55 = arith.select %53, %54, %49 : vector<16x1xi1>, vector<16x1xf32>
    %cst_21 = arith.constant 8.09891986 : f32
    %56 = vector.broadcast %cst_21 : f32 to vector<16x1xf32>
    %57 = arith.select %53, %56, %51 : vector<16x1xi1>, vector<16x1xf32>
    %c3_i32 = arith.constant 3 : i32
    %58 = vector.broadcast %c3_i32 : i32 to vector<16x1xi32>
    %59 = arith.cmpi eq, %37, %58 : vector<16x1xi32>
    %cst_22 = arith.constant 9.47111988 : f32
    %60 = vector.broadcast %cst_22 : f32 to vector<16x1xf32>
    %61 = arith.select %59, %60, %55 : vector<16x1xi1>, vector<16x1xf32>
    %cst_23 = arith.constant 4.840530e+00 : f32
    %62 = vector.broadcast %cst_23 : f32 to vector<16x1xf32>
    %63 = arith.select %59, %62, %57 : vector<16x1xi1>, vector<16x1xf32>
    %c4_i32 = arith.constant 4 : i32
    %64 = vector.broadcast %c4_i32 : i32 to vector<16x1xi32>
    %65 = arith.cmpi eq, %37, %64 : vector<16x1xi32>
    %cst_24 = arith.constant 1.123640e+01 : f32
    %66 = vector.broadcast %cst_24 : f32 to vector<16x1xf32>
    %67 = arith.select %65, %66, %61 : vector<16x1xi1>, vector<16x1xf32>
    %cst_25 = arith.constant 1.000710e+01 : f32
    %68 = vector.broadcast %cst_25 : f32 to vector<16x1xf32>
    %69 = arith.select %65, %68, %63 : vector<16x1xi1>, vector<16x1xf32>
    %c0_26 = arith.constant 0 : index
    %c0_27 = arith.constant 0 : index
    %70 = vector.load %arg2[%c0_26, %c0_27] : memref<1x256xf32, #tpu.memory_space<vmem>>, vector<1x256xf32>
    %71 = vector.broadcast %70 : vector<1x256xf32> to vector<16x256xf32>
    %72 = arith.addf %6, %71 : vector<16x256xf32>
    %c0_28 = arith.constant 0 : index
    %c0_29 = arith.constant 0 : index
    %c0_30 = arith.constant 0 : index
    %73 = vector.load %arg4[%c0_28, %c0_29, %c0_30] : memref<4x16x256xf32, #tpu.memory_space<vmem>>, vector<1x16x256xf32>
    %74 = vector.shape_cast %73 : vector<1x16x256xf32> to vector<16x256xf32>
    %75 = vector.shape_cast %72 : vector<16x256xf32> to vector<1x16x256xf32>
    tpu.vector_store %arg4[%c0_28, %c0_29, %c0_30], %75 {strides = array<i32>} : memref<4x16x256xf32, #tpu.memory_space<vmem>>, vector<1x16x256xf32>,
    %c0_31 = arith.constant 0 : index
    %c0_32 = arith.constant 0 : index
    %76 = vector.load %arg3[%c0_31, %c0_32] : memref<1x256xf32, #tpu.memory_space<vmem>>, vector<1x256xf32>
    %77 = vector.broadcast %76 : vector<1x256xf32> to vector<16x256xf32>
    %78 = arith.addf %13, %77 : vector<16x256xf32>
    %c1_33 = arith.constant 1 : index
    %c0_34 = arith.constant 0 : index
    %c0_35 = arith.constant 0 : index
    %79 = vector.load %arg4[%c1_33, %c0_34, %c0_35] : memref<4x16x256xf32, #tpu.memory_space<vmem>>, vector<1x16x256xf32>
    %80 = vector.shape_cast %79 : vector<1x16x256xf32> to vector<16x256xf32>
    %81 = vector.shape_cast %78 : vector<16x256xf32> to vector<1x16x256xf32>
    tpu.vector_store %arg4[%c1_33, %c0_34, %c0_35], %81 {strides = array<i32>} : memref<4x16x256xf32, #tpu.memory_space<vmem>>, vector<1x16x256xf32>,
    %82 = math.exp %15 : vector<16x256xf32>
    %83 = vector.broadcast %67 : vector<16x1xf32> to vector<16x256xf32>
    %84 = arith.mulf %82, %83 : vector<16x256xf32>
    %c2_36 = arith.constant 2 : index
    %c0_37 = arith.constant 0 : index
    %c0_38 = arith.constant 0 : index
    %85 = vector.load %arg4[%c2_36, %c0_37, %c0_38] : memref<4x16x256xf32, #tpu.memory_space<vmem>>, vector<1x16x256xf32>
    %86 = vector.shape_cast %85 : vector<1x16x256xf32> to vector<16x256xf32>
    %87 = vector.shape_cast %84 : vector<16x256xf32> to vector<1x16x256xf32>
    tpu.vector_store %arg4[%c2_36, %c0_37, %c0_38], %87 {strides = array<i32>} : memref<4x16x256xf32, #tpu.memory_space<vmem>>, vector<1x16x256xf32>,
    %88 = math.exp %17 : vector<16x256xf32>
    %89 = vector.broadcast %69 : vector<16x1xf32> to vector<16x256xf32>
    %90 = arith.mulf %88, %89 : vector<16x256xf32>
    %c3_39 = arith.constant 3 : index
    %c0_40 = arith.constant 0 : index
    %c0_41 = arith.constant 0 : index
    %91 = vector.load %arg4[%c3_39, %c0_40, %c0_41] : memref<4x16x256xf32, #tpu.memory_space<vmem>>, vector<1x16x256xf32>
    %92 = vector.shape_cast %91 : vector<1x16x256xf32> to vector<16x256xf32>
    %93 = vector.shape_cast %90 : vector<16x256xf32> to vector<1x16x256xf32>
    tpu.vector_store %arg4[%c3_39, %c0_40, %c0_41], %93 {strides = array<i32>} : memref<4x16x256xf32, #tpu.memory_space<vmem>>, vector<1x16x256xf32>,
    return
  }
  func.func @transform_0(%arg0: i32) -> (i32, i32, i32) {
    %c0_i32 = arith.constant 0 : i32
    %c0_i32_0 = arith.constant 0 : i32
    %c0_i32_1 = arith.constant 0 : i32
    return %c0_i32, %arg0, %c0_i32_0 : i32, i32, i32
  }
  func.func @transform_1(%arg0: i32) -> (i32, i32) {
    %c0_i32 = arith.constant 0 : i32
    %c0_i32_0 = arith.constant 0 : i32
    %c0_i32_1 = arith.constant 0 : i32
    return %c0_i32, %c0_i32_0 : i32, i32
  }
  func.func @transform_2(%arg0: i32) -> (i32, i32) {
    %c0_i32 = arith.constant 0 : i32
    %c0_i32_0 = arith.constant 0 : i32
    %c0_i32_1 = arith.constant 0 : i32
    return %c0_i32, %c0_i32_0 : i32, i32
  }
  func.func @transform_3(%arg0: i32) -> (i32, i32, i32) {
    %c0_i32 = arith.constant 0 : i32
    %c0_i32_0 = arith.constant 0 : i32
    %c0_i32_1 = arith.constant 0 : i32
    return %c0_i32, %arg0, %c0_i32_0 : i32, i32, i32
  }
}

module attributes {stable_mosaic.version = 11 : i64} {
  func.func @_loss_kernel(%arg0: i32, %arg1: memref<4x16x256xf32, #tpu.memory_space<vmem>>, %arg2: memref<1x16x256xf32, #tpu.memory_space<vmem>>, %arg3: memref<7x16x256xf32, #tpu.memory_space<vmem>>, %arg4: memref<1x1x128xf32, #tpu.memory_space<vmem>>) attributes {dimension_semantics = [#tpu.dimension_semantics<parallel>], iteration_bounds = array<i64: 1>, scalar_prefetch = 0 : i64, scratch_operands = 0 : i64, tpu.core_type = #tpu.core_type<tc>, window_params = [{transform_indices = @transform_0, window_bounds = array<i64: 4, 16, 256>}, {transform_indices = @transform_1, window_bounds = array<i64: 1, 16, 256>}, {transform_indices = @transform_2, window_bounds = array<i64: 7, 16, 256>}, {transform_indices = @transform_3, window_bounds = array<i64: 1, 1, 128>}]} {
    %c0 = arith.constant 0 : index
    %c0_0 = arith.constant 0 : index
    %c0_1 = arith.constant 0 : index
    %0 = vector.load %arg1[%c0, %c0_0, %c0_1] : memref<4x16x256xf32, #tpu.memory_space<vmem>>, vector<1x16x256xf32>
    %1 = vector.shape_cast %0 : vector<1x16x256xf32> to vector<16x256xf32>
    %2 = arith.negf %1 : vector<16x256xf32>
    %3 = math.exp %2 : vector<16x256xf32>
    %cst = arith.constant 1.000000e+00 : f32
    %4 = vector.broadcast %cst : f32 to vector<16x256xf32>
    %5 = arith.addf %4, %3 : vector<16x256xf32>
    %6 = arith.divf %4, %5 : vector<16x256xf32>
    %c1 = arith.constant 1 : index
    %c0_2 = arith.constant 0 : index
    %c0_3 = arith.constant 0 : index
    %7 = vector.load %arg1[%c1, %c0_2, %c0_3] : memref<4x16x256xf32, #tpu.memory_space<vmem>>, vector<1x16x256xf32>
    %8 = vector.shape_cast %7 : vector<1x16x256xf32> to vector<16x256xf32>
    %9 = arith.negf %8 : vector<16x256xf32>
    %10 = math.exp %9 : vector<16x256xf32>
    %cst_4 = arith.constant 1.000000e+00 : f32
    %11 = vector.broadcast %cst_4 : f32 to vector<16x256xf32>
    %12 = arith.addf %11, %10 : vector<16x256xf32>
    %13 = arith.divf %11, %12 : vector<16x256xf32>
    %c2 = arith.constant 2 : index
    %c0_5 = arith.constant 0 : index
    %c0_6 = arith.constant 0 : index
    %14 = vector.load %arg1[%c2, %c0_5, %c0_6] : memref<4x16x256xf32, #tpu.memory_space<vmem>>, vector<1x16x256xf32>
    %15 = vector.shape_cast %14 : vector<1x16x256xf32> to vector<16x256xf32>
    %c3 = arith.constant 3 : index
    %c0_7 = arith.constant 0 : index
    %c0_8 = arith.constant 0 : index
    %16 = vector.load %arg1[%c3, %c0_7, %c0_8] : memref<4x16x256xf32, #tpu.memory_space<vmem>>, vector<1x16x256xf32>
    %17 = vector.shape_cast %16 : vector<1x16x256xf32> to vector<16x256xf32>
    %c0_9 = arith.constant 0 : index
    %c0_10 = arith.constant 0 : index
    %c0_11 = arith.constant 0 : index
    %18 = vector.load %arg2[%c0_9, %c0_10, %c0_11] : memref<1x16x256xf32, #tpu.memory_space<vmem>>, vector<1x16x256xf32>
    %19 = vector.shape_cast %18 : vector<1x16x256xf32> to vector<16x256xf32>
    %20 = arith.negf %19 : vector<16x256xf32>
    %21 = math.exp %20 : vector<16x256xf32>
    %cst_12 = arith.constant 1.000000e+00 : f32
    %22 = vector.broadcast %cst_12 : f32 to vector<16x256xf32>
    %23 = arith.addf %22, %21 : vector<16x256xf32>
    %24 = arith.divf %22, %23 : vector<16x256xf32>
    %c0_13 = arith.constant 0 : index
    %c0_14 = arith.constant 0 : index
    %c0_15 = arith.constant 0 : index
    %25 = vector.load %arg3[%c0_13, %c0_14, %c0_15] : memref<7x16x256xf32, #tpu.memory_space<vmem>>, vector<1x16x256xf32>
    %26 = vector.shape_cast %25 : vector<1x16x256xf32> to vector<16x256xf32>
    %c1_16 = arith.constant 1 : index
    %c0_17 = arith.constant 0 : index
    %c0_18 = arith.constant 0 : index
    %27 = vector.load %arg3[%c1_16, %c0_17, %c0_18] : memref<7x16x256xf32, #tpu.memory_space<vmem>>, vector<1x16x256xf32>
    %28 = vector.shape_cast %27 : vector<1x16x256xf32> to vector<16x256xf32>
    %c2_19 = arith.constant 2 : index
    %c0_20 = arith.constant 0 : index
    %c0_21 = arith.constant 0 : index
    %29 = vector.load %arg3[%c2_19, %c0_20, %c0_21] : memref<7x16x256xf32, #tpu.memory_space<vmem>>, vector<1x16x256xf32>
    %30 = vector.shape_cast %29 : vector<1x16x256xf32> to vector<16x256xf32>
    %c3_22 = arith.constant 3 : index
    %c0_23 = arith.constant 0 : index
    %c0_24 = arith.constant 0 : index
    %31 = vector.load %arg3[%c3_22, %c0_23, %c0_24] : memref<7x16x256xf32, #tpu.memory_space<vmem>>, vector<1x16x256xf32>
    %32 = vector.shape_cast %31 : vector<1x16x256xf32> to vector<16x256xf32>
    %c4 = arith.constant 4 : index
    %c0_25 = arith.constant 0 : index
    %c0_26 = arith.constant 0 : index
    %33 = vector.load %arg3[%c4, %c0_25, %c0_26] : memref<7x16x256xf32, #tpu.memory_space<vmem>>, vector<1x16x256xf32>
    %34 = vector.shape_cast %33 : vector<1x16x256xf32> to vector<16x256xf32>
    %c5 = arith.constant 5 : index
    %c0_27 = arith.constant 0 : index
    %c0_28 = arith.constant 0 : index
    %35 = vector.load %arg3[%c5, %c0_27, %c0_28] : memref<7x16x256xf32, #tpu.memory_space<vmem>>, vector<1x16x256xf32>
    %36 = vector.shape_cast %35 : vector<1x16x256xf32> to vector<16x256xf32>
    %c6 = arith.constant 6 : index
    %c0_29 = arith.constant 0 : index
    %c0_30 = arith.constant 0 : index
    %37 = vector.load %arg3[%c6, %c0_29, %c0_30] : memref<7x16x256xf32, #tpu.memory_space<vmem>>, vector<1x16x256xf32>
    %38 = vector.shape_cast %37 : vector<1x16x256xf32> to vector<16x256xf32>
    %39 = arith.subf %6, %26 : vector<16x256xf32>
    %40 = arith.mulf %39, %36 : vector<16x256xf32>
    %41 = arith.mulf %40, %40 : vector<16x256xf32>
    %42 = vector.shape_cast %41 : vector<16x256xf32> to vector<1x16x256xf32>
    %cst_31 = arith.constant dense<0.000000e+00> : vector<1xf32>
    %43 = vector.multi_reduction <add>, %42, %cst_31 [1, 2] : vector<1x16x256xf32> to vector<1xf32>
    %44 = vector.shape_cast %43 : vector<1xf32> to vector<1x1x1xf32>
    %45 = vector.extract %44[0, 0, 0] : f32 from vector<1x1x1xf32>
    %cst_32 = arith.constant 5.000000e-01 : f32
    %46 = arith.mulf %cst_32, %45 : f32
    %cst_33 = arith.constant 1.000000e+00 : f32
    %47 = arith.mulf %cst_33, %46 : f32
    %48 = arith.subf %13, %28 : vector<16x256xf32>
    %49 = arith.mulf %48, %36 : vector<16x256xf32>
    %50 = arith.mulf %49, %49 : vector<16x256xf32>
    %51 = vector.shape_cast %50 : vector<16x256xf32> to vector<1x16x256xf32>
    %cst_34 = arith.constant dense<0.000000e+00> : vector<1xf32>
    %52 = vector.multi_reduction <add>, %51, %cst_34 [1, 2] : vector<1x16x256xf32> to vector<1xf32>
    %53 = vector.shape_cast %52 : vector<1xf32> to vector<1x1x1xf32>
    %54 = vector.extract %53[0, 0, 0] : f32 from vector<1x1x1xf32>
    %cst_35 = arith.constant 5.000000e-01 : f32
    %55 = arith.mulf %cst_35, %54 : f32
    %cst_36 = arith.constant 1.000000e+00 : f32
    %56 = arith.mulf %cst_36, %55 : f32
    %57 = arith.subf %15, %30 : vector<16x256xf32>
    %58 = arith.mulf %57, %36 : vector<16x256xf32>
    %59 = arith.mulf %58, %58 : vector<16x256xf32>
    %60 = vector.shape_cast %59 : vector<16x256xf32> to vector<1x16x256xf32>
    %cst_37 = arith.constant dense<0.000000e+00> : vector<1xf32>
    %61 = vector.multi_reduction <add>, %60, %cst_37 [1, 2] : vector<1x16x256xf32> to vector<1xf32>
    %62 = vector.shape_cast %61 : vector<1xf32> to vector<1x1x1xf32>
    %63 = vector.extract %62[0, 0, 0] : f32 from vector<1x1x1xf32>
    %cst_38 = arith.constant 5.000000e-01 : f32
    %64 = arith.mulf %cst_38, %63 : f32
    %cst_39 = arith.constant 1.000000e+00 : f32
    %65 = arith.mulf %cst_39, %64 : f32
    %66 = arith.subf %17, %32 : vector<16x256xf32>
    %67 = arith.mulf %66, %36 : vector<16x256xf32>
    %68 = arith.mulf %67, %67 : vector<16x256xf32>
    %69 = vector.shape_cast %68 : vector<16x256xf32> to vector<1x16x256xf32>
    %cst_40 = arith.constant dense<0.000000e+00> : vector<1xf32>
    %70 = vector.multi_reduction <add>, %69, %cst_40 [1, 2] : vector<1x16x256xf32> to vector<1xf32>
    %71 = vector.shape_cast %70 : vector<1xf32> to vector<1x1x1xf32>
    %72 = vector.extract %71[0, 0, 0] : f32 from vector<1x1x1xf32>
    %cst_41 = arith.constant 5.000000e-01 : f32
    %73 = arith.mulf %cst_41, %72 : f32
    %cst_42 = arith.constant 1.000000e+00 : f32
    %74 = arith.mulf %cst_42, %73 : f32
    %75 = arith.subf %24, %34 : vector<16x256xf32>
    %76 = arith.mulf %38, %75 : vector<16x256xf32>
    %77 = arith.mulf %76, %75 : vector<16x256xf32>
    %78 = vector.shape_cast %77 : vector<16x256xf32> to vector<1x16x256xf32>
    %cst_43 = arith.constant dense<0.000000e+00> : vector<1xf32>
    %79 = vector.multi_reduction <add>, %78, %cst_43 [1, 2] : vector<1x16x256xf32> to vector<1xf32>
    %80 = vector.shape_cast %79 : vector<1xf32> to vector<1x1x1xf32>
    %81 = vector.extract %80[0, 0, 0] : f32 from vector<1x1x1xf32>
    %cst_44 = arith.constant 5.000000e-01 : f32
    %82 = arith.mulf %cst_44, %81 : f32
    %83 = arith.addf %47, %56 : f32
    %84 = arith.addf %83, %65 : f32
    %85 = arith.addf %84, %74 : f32
    %86 = arith.addf %85, %82 : f32
    %87 = vector.broadcast %86 : f32 to vector<1x1x128xf32>
    %c0_45 = arith.constant 0 : index
    %c0_46 = arith.constant 0 : index
    %c0_47 = arith.constant 0 : index
    %88 = vector.load %arg4[%c0_45, %c0_46, %c0_47] : memref<1x1x128xf32, #tpu.memory_space<vmem>>, vector<1x1x128xf32>
    tpu.vector_store %arg4[%c0_45, %c0_46, %c0_47], %87 {strides = array<i32>} : memref<1x1x128xf32, #tpu.memory_space<vmem>>, vector<1x1x128xf32>,
    return
  }
  func.func @transform_0(%arg0: i32) -> (i32, i32, i32) {
    %c0_i32 = arith.constant 0 : i32
    %c0_i32_0 = arith.constant 0 : i32
    %c0_i32_1 = arith.constant 0 : i32
    return %c0_i32, %arg0, %c0_i32_0 : i32, i32, i32
  }
  func.func @transform_1(%arg0: i32) -> (i32, i32, i32) {
    %c0_i32 = arith.constant 0 : i32
    %c0_i32_0 = arith.constant 0 : i32
    %c0_i32_1 = arith.constant 0 : i32
    return %c0_i32, %arg0, %c0_i32_0 : i32, i32, i32
  }
  func.func @transform_2(%arg0: i32) -> (i32, i32, i32) {
    %c0_i32 = arith.constant 0 : i32
    %c0_i32_0 = arith.constant 0 : i32
    %c0_i32_1 = arith.constant 0 : i32
    return %c0_i32, %arg0, %c0_i32_0 : i32, i32, i32
  }
  func.func @transform_3(%arg0: i32) -> (i32, i32, i32) {
    %c0_i32 = arith.constant 0 : i32
    %c0_i32_0 = arith.constant 0 : i32
    %c0_i32_1 = arith.constant 0 : i32
    return %arg0, %c0_i32, %c0_i32_0 : i32, i32, i32
  }
}

</mosaic_0001>

<llo_original>
// kernel: squeeze.92
$region0: #{squeeze.92}
  %s0 = inlined_call_operand.vmem [shape: f32[1,10,256], index: 0, kind: input, shape index: {}]
  %s1 = inlined_call_operand.vmem [shape: f32[2,5,16,16], index: 1, kind: output, shape index: {}]
  %v2 = vld [vmem:[%s0] sm:$0xff]
  %vm3 = vcmask 130048
  %4 = vst.msk [vmem:[%s1] ss:$16 sm:$0x3] %vm3, %v2
  %5 = vst.msk [vmem:[%s1] ss:$16 sm:$0xc] %vm3, %v2
  %6 = vst.msk [vmem:[%s1] ss:$16 sm:$0x30] %vm3, %v2
  %7 = vst.msk [vmem:[%s1] ss:$16 sm:$0xc0] %vm3, %v2
  %s8 = scalar_lea.vmem %s0, 8
  %v9 = vld [vmem:[%s8] sm:$0xff]
  %vm10 = vcmask 130048
  %s11 = scalar_lea.vmem %s1, 8
  %12 = vst.msk [vmem:[%s11] ss:$16 sm:$0x3] %vm10, %v9
  %s13 = scalar_lea.vmem %s1, 8
  %14 = vst.msk [vmem:[%s13] ss:$16 sm:$0xc] %vm10, %v9
  %s15 = scalar_lea.vmem %s1, 8
  %16 = vst.msk [vmem:[%s15] ss:$16 sm:$0x30] %vm10, %v9
  %s17 = scalar_lea.vmem %s1, 8
  %18 = vst.msk [vmem:[%s17] ss:$16 sm:$0xc0] %vm10, %v9
  %s19 = scalar_lea.vmem %s0, 16
  %v20 = vld [vmem:[%s19] sm:$0x3]
  %vm21 = vcmask 130048
  %s22 = scalar_lea.vmem %s1, 128
  %23 = vst.msk [vmem:[%s22] ss:$16 sm:$0x3] %vm21, %v20
  %s24 = scalar_lea.vmem %s0, 24
  %v25 = vld [vmem:[%s24] sm:$0x3]
  %vm26 = vcmask 130048
  %s27 = scalar_lea.vmem %s1, 136
  %28 = vst.msk [vmem:[%s27] ss:$16 sm:$0x3] %vm26, %v25
  %v29 = vld.sshfl [vmem:[%s0] sm:$0xff pattern:$0xb3a29180]
  %30 = vrot.lane.b32.xlu0 %v29, 112
  %v31 = vpop.permute.xlu0 %30
  %vm32 = vcmask 130048
  %s33 = scalar_lea.vmem %s1, 1
  %34 = vst.msk [vmem:[%s33] ss:$8 sm:$0xf] %vm32, %v31
  %s35 = scalar_lea.vmem %s1, 1
  %36 = vst.msk [vmem:[%s35] ss:$8 sm:$0xf0] %vm32, %v31
  %s37 = scalar_lea.vmem %s0, 4
  %v38 = vld.sshfl [vmem:[%s37] sm:$0xff pattern:$0xb3a29180]
  %39 = vrot.lane.b32.xlu0 %v38, 112
  %v40 = vpop.permute.xlu0 %39
  %vm41 = vcmask 130048
  %s42 = scalar_lea.vmem %s1, 65
  %43 = vst.msk [vmem:[%s42] ss:$8 sm:$0xf] %vm41, %v40
  %s44 = scalar_lea.vmem %s1, 65
  %45 = vst.msk [vmem:[%s44] ss:$8 sm:$0xf0] %vm41, %v40
  %s46 = scalar_lea.vmem %s0, 16
  %v47 = vld.sshfl [vmem:[%s46] sm:$0xff pattern:$0x99999180]
  %48 = vrot.lane.b32.xlu0 %v47, 112
  %v49 = vpop.permute.xlu0 %48
  %vm50 = vcmask 130048
  %s51 = scalar_lea.vmem %s1, 129
  %52 = vst.msk [vmem:[%s51] ss:$8 sm:$0xf] %vm50, %v49
  %v53 = vld.sshfl [vmem:[%s0] sm:$0xff pattern:$0xb3a29180]
  %54 = vrot.lane.b32.xlu0 %v53, 96
  %v55 = vpop.permute.xlu0 %54
  %vm56 = vcmask 130048
  %s57 = scalar_lea.vmem %s1, 2
  %58 = vst.msk [vmem:[%s57] ss:$8 sm:$0xf] %vm56, %v55
  %s59 = scalar_lea.vmem %s1, 2
  %60 = vst.msk [vmem:[%s59] ss:$8 sm:$0xf0] %vm56, %v55
  %s61 = scalar_lea.vmem %s0, 4
  %v62 = vld.sshfl [vmem:[%s61] sm:$0xff pattern:$0xb3a29180]
  %63 = vrot.lane.b32.xlu0 %v62, 96
  %v64 = vpop.permute.xlu0 %63
  %vm65 = vcmask 130048
  %s66 = scalar_lea.vmem %s1, 66
  %67 = vst.msk [vmem:[%s66] ss:$8 sm:$0xf] %vm65, %v64
  %s68 = scalar_lea.vmem %s1, 66
  %69 = vst.msk [vmem:[%s68] ss:$8 sm:$0xf0] %vm65, %v64
  %s70 = scalar_lea.vmem %s0, 16
  %v71 = vld.sshfl [vmem:[%s70] sm:$0xff pattern:$0x99999180]
  %72 = vrot.lane.b32.xlu0 %v71, 96
  %v73 = vpop.permute.xlu0 %72
  %vm74 = vcmask 130048
  %s75 = scalar_lea.vmem %s1, 130
  %76 = vst.msk [vmem:[%s75] ss:$8 sm:$0xf] %vm74, %v73
  %v77 = vld.sshfl [vmem:[%s0] sm:$0xff pattern:$0xb3a29180]
  %78 = vrot.lane.b32.xlu0 %v77, 80
  %v79 = vpop.permute.xlu0 %78
  %vm80 = vcmask 130048
  %s81 = scalar_lea.vmem %s1, 3
  %82 = vst.msk [vmem:[%s81] ss:$8 sm:$0xf] %vm80, %v79
  %s83 = scalar_lea.vmem %s1, 3
  %84 = vst.msk [vmem:[%s83] ss:$8 sm:$0xf0] %vm80, %v79
  %s85 = scalar_lea.vmem %s0, 4
  %v86 = vld.sshfl [vmem:[%s85] sm:$0xff pattern:$0xb3a29180]
  %87 = vrot.lane.b32.xlu0 %v86, 80
  %v88 = vpop.permute.xlu0 %87
  %vm89 = vcmask 130048
  %s90 = scalar_lea.vmem %s1, 67
  %91 = vst.msk [vmem:[%s90] ss:$8 sm:$0xf] %vm89, %v88
  %s92 = scalar_lea.vmem %s1, 67
  %93 = vst.msk [vmem:[%s92] ss:$8 sm:$0xf0] %vm89, %v88
  %s94 = scalar_lea.vmem %s0, 16
  %v95 = vld.sshfl [vmem:[%s94] sm:$0xff pattern:$0x99999180]
  %96 = vrot.lane.b32.xlu0 %v95, 80
  %v97 = vpop.permute.xlu0 %96
  %vm98 = vcmask 130048
  %s99 = scalar_lea.vmem %s1, 131
  %100 = vst.msk [vmem:[%s99] ss:$8 sm:$0xf] %vm98, %v97
  %v101 = vld.sshfl [vmem:[%s0] sm:$0xff pattern:$0xb3a29180]
  %102 = vrot.lane.b32.xlu0 %v101, 64
  %v103 = vpop.permute.xlu0 %102
  %vm104 = vcmask 130048
  %s105 = scalar_lea.vmem %s1, 4
  %106 = vst.msk [vmem:[%s105] ss:$8 sm:$0xf] %vm104, %v103
  %s107 = scalar_lea.vmem %s1, 4
  %108 = vst.msk [vmem:[%s107] ss:$8 sm:$0xf0] %vm104, %v103
  %s109 = scalar_lea.vmem %s0, 4
  %v110 = vld.sshfl [vmem:[%s109] sm:$0xff pattern:$0xb3a29180]
  %111 = vrot.lane.b32.xlu0 %v110, 64
  %v112 = vpop.permute.xlu0 %111
  %vm113 = vcmask 130048
  %s114 = scalar_lea.vmem %s1, 68
  %115 = vst.msk [vmem:[%s114] ss:$8 sm:$0xf] %vm113, %v112
  %s116 = scalar_lea.vmem %s1, 68
  %117 = vst.msk [vmem:[%s116] ss:$8 sm:$0xf0] %vm113, %v112
  %s118 = scalar_lea.vmem %s0, 16
  %v119 = vld.sshfl [vmem:[%s118] sm:$0xff pattern:$0x99999180]
  %120 = vrot.lane.b32.xlu0 %v119, 64
  %v121 = vpop.permute.xlu0 %120
  %vm122 = vcmask 130048
  %s123 = scalar_lea.vmem %s1, 132
  %124 = vst.msk [vmem:[%s123] ss:$8 sm:$0xf] %vm122, %v121
  %v125 = vld.sshfl [vmem:[%s0] sm:$0xff pattern:$0xb3a29180]
  %126 = vrot.lane.b32.xlu0 %v125, 48
  %v127 = vpop.permute.xlu0 %126
  %vm128 = vcmask 130048
  %s129 = scalar_lea.vmem %s1, 5
  %130 = vst.msk [vmem:[%s129] ss:$8 sm:$0xf] %vm128, %v127
  %s131 = scalar_lea.vmem %s1, 5
  %132 = vst.msk [vmem:[%s131] ss:$8 sm:$0xf0] %vm128, %v127
  %s133 = scalar_lea.vmem %s0, 4
  %v134 = vld.sshfl [vmem:[%s133] sm:$0xff pattern:$0xb3a29180]
  %135 = vrot.lane.b32.xlu0 %v134, 48
  %v136 = vpop.permute.xlu0 %135
  %vm137 = vcmask 130048
  %s138 = scalar_lea.vmem %s1, 69
  %139 = vst.msk [vmem:[%s138] ss:$8 sm:$0xf] %vm137, %v136
  %s140 = scalar_lea.vmem %s1, 69
  %141 = vst.msk [vmem:[%s140] ss:$8 sm:$0xf0] %vm137, %v136
  %s142 = scalar_lea.vmem %s0, 16
  %v143 = vld.sshfl [vmem:[%s142] sm:$0xff pattern:$0x99999180]
  %144 = vrot.lane.b32.xlu0 %v143, 48
  %v145 = vpop.permute.xlu0 %144
  %vm146 = vcmask 130048
  %s147 = scalar_lea.vmem %s1, 133
  %148 = vst.msk [vmem:[%s147] ss:$8 sm:$0xf] %vm146, %v145
  %v149 = vld.sshfl [vmem:[%s0] sm:$0xff pattern:$0xb3a29180]
  %150 = vrot.lane.b32.xlu0 %v149, 32
  %v151 = vpop.permute.xlu0 %150
  %vm152 = vcmask 130048
  %s153 = scalar_lea.vmem %s1, 6
  %154 = vst.msk [vmem:[%s153] ss:$8 sm:$0xf] %vm152, %v151
  %s155 = scalar_lea.vmem %s1, 6
  %156 = vst.msk [vmem:[%s155] ss:$8 sm:$0xf0] %vm152, %v151
  %s157 = scalar_lea.vmem %s0, 4
  %v158 = vld.sshfl [vmem:[%s157] sm:$0xff pattern:$0xb3a29180]
  %159 = vrot.lane.b32.xlu0 %v158, 32
  %v160 = vpop.permute.xlu0 %159
  %vm161 = vcmask 130048
  %s162 = scalar_lea.vmem %s1, 70
  %163 = vst.msk [vmem:[%s162] ss:$8 sm:$0xf] %vm161, %v160
  %s164 = scalar_lea.vmem %s1, 70
  %165 = vst.msk [vmem:[%s164] ss:$8 sm:$0xf0] %vm161, %v160
  %s166 = scalar_lea.vmem %s0, 16
  %v167 = vld.sshfl [vmem:[%s166] sm:$0xff pattern:$0x99999180]
  %168 = vrot.lane.b32.xlu0 %v167, 32
  %v169 = vpop.permute.xlu0 %168
  %vm170 = vcmask 130048
  %s171 = scalar_lea.vmem %s1, 134
  %172 = vst.msk [vmem:[%s171] ss:$8 sm:$0xf] %vm170, %v169
  %v173 = vld.sshfl [vmem:[%s0] sm:$0xff pattern:$0xb3a29180]
  %174 = vrot.lane.b32.xlu0 %v173, 16
  %v175 = vpop.permute.xlu0 %174
  %vm176 = vcmask 130048
  %s177 = scalar_lea.vmem %s1, 7
  %178 = vst.msk [vmem:[%s177] ss:$8 sm:$0xf] %vm176, %v175
  %s179 = scalar_lea.vmem %s1, 7
  %180 = vst.msk [vmem:[%s179] ss:$8 sm:$0xf0] %vm176, %v175
  %s181 = scalar_lea.vmem %s0, 4
  %v182 = vld.sshfl [vmem:[%s181] sm:$0xff pattern:$0xb3a29180]
  %183 = vrot.lane.b32.xlu0 %v182, 16
  %v184 = vpop.permute.xlu0 %183
  %vm185 = vcmask 130048
  %s186 = scalar_lea.vmem %s1, 71
  %187 = vst.msk [vmem:[%s186] ss:$8 sm:$0xf] %vm185, %v184
  %s188 = scalar_lea.vmem %s1, 71
  %189 = vst.msk [vmem:[%s188] ss:$8 sm:$0xf0] %vm185, %v184
  %s190 = scalar_lea.vmem %s0, 16
  %v191 = vld.sshfl [vmem:[%s190] sm:$0xff pattern:$0x99999180]
  %192 = vrot.lane.b32.xlu0 %v191, 16
  %v193 = vpop.permute.xlu0 %192
  %vm194 = vcmask 130048
  %s195 = scalar_lea.vmem %s1, 135
  %196 = vst.msk [vmem:[%s195] ss:$8 sm:$0xf] %vm194, %v193

// kernel: region_loss_forward.2
$region0: #{region_loss_forward.2}
  #allocation0 [shape = 'u32[]', space=smem, size = 0x4, offset = 0x4, fixed_abs, tag = 'smem constant byte address 0x4 - core index']
  #allocation1 [shape = 'u32[144,128]{1,0:T(1,128)}', space=vmem, size = 0x12000, scoped, tag = 'internal scratch']
  %s0 = inlined_call_operand.vmem [shape: f32[4,16,256], index: 0, kind: input, shape index: {}]
  %s1 = inlined_call_operand.vmem [shape: f32[1,256], index: 1, kind: input, shape index: {}]
  %s2 = inlined_call_operand.vmem [shape: f32[1,256], index: 2, kind: input, shape index: {}]
  %s3 = inlined_call_operand.vmem [shape: f32[4,16,256], index: 3, kind: output, shape index: {}]
  %s4 = sld [smem:[#allocation0]]
  $region22: #{region_loss_forward.2} parent=0
    _
  %s6 = ssub.s32 1, %s4
  %s7 = scalar_select 0, %s6, %s4
  // Predicated region
  $region2: #{region_loss_forward.2} parent=0 // pred_check
    _
  $region3: #{region_loss_forward.2} parent=0 // pred_check_branch
    %9 = sbr.rel (0) target = $region5
  $region4: #{region_loss_forward.2} parent=0 // pred_region
    _
  $region5: #{region_loss_forward.2} parent=0 // pred_fallthru
    _
  // Predicated region
  $region6: #{region_loss_forward.2} parent=0 // pred_check
    _
  $region7: #{region_loss_forward.2} parent=0 // pred_check_branch
    %11 = sbr.rel (0) target = $region9
  $region8: #{region_loss_forward.2} parent=0 // pred_region
    _
  $region9: #{region_loss_forward.2} parent=0 // pred_fallthru
    _
  // Predicated region
  $region10: #{region_loss_forward.2} parent=0 // pred_check
    _
  $region11: #{region_loss_forward.2} parent=0 // pred_check_branch
    %13 = sbr.rel (0) target = $region13
  $region12: #{region_loss_forward.2} parent=0 // pred_region
    _
  $region13: #{region_loss_forward.2} parent=0 // pred_fallthru
    _
  %v14 = vld [vmem:[%s0] sm:$0xff]
  %v15 = vld [vmem:[%s0 + $0x8] sm:$0xff]
  %v16 = vld [vmem:[%s0 + $0x10] sm:$0xff]
  %v17 = vld [vmem:[%s0 + $0x18] sm:$0xff]
  %v18 = vxor.u32 %v14, 2147483648
  %v19 = vxor.u32 %v15, 2147483648
  %v20 = vxor.u32 %v16, 2147483648
  %v21 = vxor.u32 %v17, 2147483648
  %v22 = vmul.f32 %v18, 1.442695
  %v23 = vpow.pop %v22
  %v24 = vmul.f32 %v19, 1.442695
  %v25 = vpow.pop %v24
  %v26 = vmul.f32 %v20, 1.442695
  %v27 = vpow.pop %v26
  %v28 = vmul.f32 %v21, 1.442695
  %v29 = vpow.pop %v28
  %v30 = vadd.f32 %v23, 1.0
  %v31 = vadd.f32 %v25, 1.0
  %v32 = vadd.f32 %v27, 1.0
  %v33 = vadd.f32 %v29, 1.0
  %v34 = vrcp.pop %v30
  %v35 = vmul.f32 1.0, %v34
  %v36 = vrcp.pop %v31
  %v37 = vmul.f32 1.0, %v36
  %v38 = vrcp.pop %v32
  %v39 = vmul.f32 1.0, %v38
  %v40 = vrcp.pop %v33
  %v41 = vmul.f32 1.0, %v40
  %s42 = scalar_lea.vmem %s0, 32
  %v43 = vld [vmem:[%s42] sm:$0xff]
  %v44 = vld [vmem:[%s42 + $0x8] sm:$0xff]
  %v45 = vld [vmem:[%s42 + $0x10] sm:$0xff]
  %v46 = vld [vmem:[%s42 + $0x18] sm:$0xff]
  %v47 = vxor.u32 %v43, 2147483648
  %v48 = vxor.u32 %v44, 2147483648
  %v49 = vxor.u32 %v45, 2147483648
  %v50 = vxor.u32 %v46, 2147483648
  %v51 = vmul.f32 %v47, 1.442695
  %v52 = vpow.pop %v51
  %v53 = vmul.f32 %v48, 1.442695
  %v54 = vpow.pop %v53
  %v55 = vmul.f32 %v49, 1.442695
  %v56 = vpow.pop %v55
  %v57 = vmul.f32 %v50, 1.442695
  %v58 = vpow.pop %v57
  %v59 = vadd.f32 %v52, 1.0
  %v60 = vadd.f32 %v54, 1.0
  %v61 = vadd.f32 %v56, 1.0
  %v62 = vadd.f32 %v58, 1.0
  %v63 = vrcp.pop %v59
  %v64 = vmul.f32 1.0, %v63
  %v65 = vrcp.pop %v60
  %v66 = vmul.f32 1.0, %v65
  %v67 = vrcp.pop %v61
  %v68 = vmul.f32 1.0, %v67
  %v69 = vrcp.pop %v62
  %v70 = vmul.f32 1.0, %v69
  %s71 = scalar_lea.vmem %s0, 64
  %v72 = vld [vmem:[%s71] sm:$0xff]
  %v73 = vld [vmem:[%s71 + $0x8] sm:$0xff]
  %v74 = vld [vmem:[%s71 + $0x10] sm:$0xff]
  %v75 = vld [vmem:[%s71 + $0x18] sm:$0xff]
  %s76 = scalar_lea.vmem %s0, 96
  %v77 = vld [vmem:[%s76] sm:$0xff]
  %v78 = vld [vmem:[%s76 + $0x8] sm:$0xff]
  %v79 = vld [vmem:[%s76 + $0x10] sm:$0xff]
  %v80 = vld [vmem:[%s76 + $0x18] sm:$0xff]
  %s81 = smul.u32 0, 16
  %v82 = vlaneseq
  %v83 = vshrl.u32 %v82, 7
  %v84 = vadd.s32 %v83, 8
  %v85 = vstv %s81
  %v86 = vadd.s32 %v83, %v85
  %v87 = vadd.s32 %v84, %v85
  %vm88 = vcmp.lt.s32.totalorder %v86, 0
  %v89 = vsub.s32 0, %v86
  %v90 = vsel %vm88, %v89, %v86
  %v91 = vmul.u32.u64.compose %v90, 3435973837
  %v92 = vextract.low.u32 %v91
  %v93 = vextract.high.u32 %v91
  %v94 = vshrl.u32 %v93, 2
  %v95 = vmul.u32 %v94, 5
  %v96 = vsub.s32 %v90, %v95
  %v97 = vsub.s32 0, %v96
  %v98 = vsel %vm88, %v97, %v96
  %vm99 = vcmp.lt.s32.totalorder %v87, 0
  %v100 = vsub.s32 0, %v87
  %v101 = vsel %vm99, %v100, %v87
  %v102 = vmul.u32.u64.compose %v101, 3435973837
  %v103 = vextract.low.u32 %v102
  %v104 = vextract.high.u32 %v102
  %v105 = vshrl.u32 %v104, 2
  %v106 = vmul.u32 %v105, 5
  %v107 = vsub.s32 %v101, %v106
  %v108 = vsub.s32 0, %v107
  %v109 = vsel %vm99, %v108, %v107
  %vm110 = vcmp.ne.s32.totalorder %v98, 0
  %vm111 = vcmp.ne.s32.totalorder %v109, 0
  %vm112 = vcmp.lt.s32.totalorder %v98, 0
  %vm113 = vcmp.lt.s32.totalorder %v109, 0
  %vm114 = vmand %vm112, %vm110
  %vm115 = vmand %vm113, %vm111
  %v116 = vadd.s32 %v98, 5
  %v117 = vadd.s32 %v109, 5
  %v118 = vsel %vm114, %v116, %v98
  %v119 = vsel %vm115, %v117, %v109
  %vm120 = vcmp.eq.s32.totalorder %v118, 0
  %vm121 = vcmp.eq.s32.totalorder %v119, 0
  %v122 = vsel %vm120, 1.3221, 0.0
  %v123 = vsel %vm121, 1.3221, 0.0
  %v124 = vsel %vm120, 1.73145, 0.0
  %v125 = vsel %vm121, 1.73145, 0.0
  %vm126 = vcmp.eq.s32.totalorder %v118, 1
  %vm127 = vcmp.eq.s32.totalorder %v119, 1
  %v128 = vsel %vm126, 3.19275, %v122
  %v129 = vsel %vm127, 3.19275, %v123
  %v130 = vsel %vm126, 4.00944, %v124
  %v131 = vsel %vm127, 4.00944, %v125
  %vm132 = vcmp.eq.s32.totalorder %v118, 2
  %vm133 = vcmp.eq.s32.totalorder %v119, 2
  %v134 = vsel %vm132, 5.05587, %v128
  %v135 = vsel %vm133, 5.05587, %v129
  %v136 = vsel %vm132, 8.09892, %v130
  %v137 = vsel %vm133, 8.09892, %v131
  %vm138 = vcmp.eq.s32.totalorder %v118, 3
  %vm139 = vcmp.eq.s32.totalorder %v119, 3
  %v140 = vsel %vm138, 9.47112, %v134
  %v141 = vsel %vm139, 9.47112, %v135
  %v142 = vsel %vm138, 4.84053, %v136
  %v143 = vsel %vm139, 4.84053, %v137
  %vm144 = vcmp.eq.s32.totalorder %v118, 4
  %vm145 = vcmp.eq.s32.totalorder %v119, 4
  %v146 = vsel %vm144, 11.2364, %v140
  %v147 = vsel %vm145, 11.2364, %v141
  %v148 = vsel %vm144, 10.0071, %v142
  %v149 = vsel %vm145, 10.0071, %v143
  %v150 = vld [vmem:[%s1] sm:$0x3]
  %v152 = vlaneseq
  %v153 = vshrl.u32 %v152, 7
  %v154 = vsub.s32 0, %v153
  %v155 = vrot.slane %v150, %v154
  %v156 = vlaneseq
  %v157 = vshrl.u32 %v156, 7
  %v158 = vsub.s32 1, %v157
  %v159 = vrot.slane %v150, %v158
  %v162 = vadd.f32 %v35, %v155
  %v163 = vadd.f32 %v37, %v159
  %v164 = vadd.f32 %v39, %v155
  %v165 = vadd.f32 %v41, %v159
  %166 = vst [vmem:[%s3] sm:$0xff] %v162
  %167 = vst [vmem:[%s3 + $0x8] sm:$0xff] %v163
  %168 = vst [vmem:[%s3 + $0x10] sm:$0xff] %v164
  %169 = vst [vmem:[%s3 + $0x18] sm:$0xff] %v165
  %v170 = vld [vmem:[%s2] sm:$0x3]
  %v172 = vlaneseq
  %v173 = vshrl.u32 %v172, 7
  %v174 = vsub.s32 0, %v173
  %v175 = vrot.slane %v170, %v174
  %v176 = vlaneseq
  %v177 = vshrl.u32 %v176, 7
  %v178 = vsub.s32 1, %v177
  %v179 = vrot.slane %v170, %v178
  %v182 = vadd.f32 %v64, %v175
  %v183 = vadd.f32 %v66, %v179
  %v184 = vadd.f32 %v68, %v175
  %v185 = vadd.f32 %v70, %v179
  %s186 = scalar_lea.vmem %s3, 32
  %187 = vst [vmem:[%s186] sm:$0xff] %v182
  %188 = vst [vmem:[%s186 + $0x8] sm:$0xff] %v183
  %189 = vst [vmem:[%s186 + $0x10] sm:$0xff] %v184
  %190 = vst [vmem:[%s186 + $0x18] sm:$0xff] %v185
  %v191 = vmul.f32 %v72, 1.442695
  %v192 = vpow.pop %v191
  %v193 = vmul.f32 %v73, 1.442695
  %v194 = vpow.pop %v193
  %v195 = vmul.f32 %v74, 1.442695
  %v196 = vpow.pop %v195
  %v197 = vmul.f32 %v75, 1.442695
  %v198 = vpow.pop %v197
  %v199 = vmul.f32 %v192, %v146
  %v200 = vmul.f32 %v194, %v146
  %v201 = vmul.f32 %v196, %v147
  %v202 = vmul.f32 %v198, %v147
  %s203 = scalar_lea.vmem %s3, 64
  %204 = vst [vmem:[%s203] sm:$0xff] %v199
  %205 = vst [vmem:[%s203 + $0x8] sm:$0xff] %v200
  %206 = vst [vmem:[%s203 + $0x10] sm:$0xff] %v201
  %207 = vst [vmem:[%s203 + $0x18] sm:$0xff] %v202
  %v208 = vmul.f32 %v77, 1.442695
  %v209 = vpow.pop %v208
  %v210 = vmul.f32 %v78, 1.442695
  %v211 = vpow.pop %v210
  %v212 = vmul.f32 %v79, 1.442695
  %v213 = vpow.pop %v212
  %v214 = vmul.f32 %v80, 1.442695
  %v215 = vpow.pop %v214
  %v216 = vmul.f32 %v209, %v148
  %v217 = vmul.f32 %v211, %v148
  %v218 = vmul.f32 %v213, %v149
  %v219 = vmul.f32 %v215, %v149
  %s220 = scalar_lea.vmem %s3, 96
  %221 = vst [vmem:[%s220] sm:$0xff] %v216
  %222 = vst [vmem:[%s220 + $0x8] sm:$0xff] %v217
  %223 = vst [vmem:[%s220 + $0x10] sm:$0xff] %v218
  %224 = vst [vmem:[%s220 + $0x18] sm:$0xff] %v219
  // Predicated region
  $region14: #{region_loss_forward.2} parent=0 // pred_check
    _
  $region15: #{region_loss_forward.2} parent=0 // pred_check_branch
    %226 = sbr.rel (0) target = $region17
  $region16: #{region_loss_forward.2} parent=0 // pred_region
    _
  $region17: #{region_loss_forward.2} parent=0 // pred_fallthru
    _
  // Predicated region
  $region18: #{region_loss_forward.2} parent=0 // pred_check
    _
  $region19: #{region_loss_forward.2} parent=0 // pred_check_branch
    %228 = sbr.rel (0) target = $region21
  $region20: #{region_loss_forward.2} parent=0 // pred_region
    _
  $region21: #{region_loss_forward.2} parent=0 // pred_fallthru
    _

// kernel: region_loss_forward.3
$region0: #{region_loss_forward.3}
  #allocation0 [shape = 'u32[]', space=smem, size = 0x4, offset = 0x4, fixed_abs, tag = 'smem constant byte address 0x4 - core index']
  #allocation1 [shape = 'u32[144,128]{1,0:T(1,128)}', space=vmem, size = 0x12000, scoped, tag = 'internal scratch']
  %s0 = inlined_call_operand.vmem [shape: f32[4,16,256], index: 0, kind: input, shape index: {}]
  %s1 = inlined_call_operand.vmem [shape: f32[1,16,256], index: 1, kind: input, shape index: {}]
  %s2 = inlined_call_operand.vmem [shape: f32[7,16,256], index: 2, kind: input, shape index: {}]
  %s3 = inlined_call_operand.vmem [shape: f32[1,1,128], index: 3, kind: output, shape index: {}]
  %s4 = sld [smem:[#allocation0]]
  $region22: #{region_loss_forward.3} parent=0
    _
  %s6 = ssub.s32 1, %s4
  %s7 = scalar_select 0, %s6, %s4
  // Predicated region
  $region2: #{region_loss_forward.3} parent=0 // pred_check
    _
  $region3: #{region_loss_forward.3} parent=0 // pred_check_branch
    %9 = sbr.rel (0) target = $region5
  $region4: #{region_loss_forward.3} parent=0 // pred_region
    _
  $region5: #{region_loss_forward.3} parent=0 // pred_fallthru
    _
  // Predicated region
  $region6: #{region_loss_forward.3} parent=0 // pred_check
    _
  $region7: #{region_loss_forward.3} parent=0 // pred_check_branch
    %11 = sbr.rel (0) target = $region9
  $region8: #{region_loss_forward.3} parent=0 // pred_region
    _
  $region9: #{region_loss_forward.3} parent=0 // pred_fallthru
    _
  // Predicated region
  $region10: #{region_loss_forward.3} parent=0 // pred_check
    _
  $region11: #{region_loss_forward.3} parent=0 // pred_check_branch
    %13 = sbr.rel (0) target = $region13
  $region12: #{region_loss_forward.3} parent=0 // pred_region
    _
  $region13: #{region_loss_forward.3} parent=0 // pred_fallthru
    _
  %v14 = vld [vmem:[%s0] sm:$0xff]
  %v15 = vld [vmem:[%s0 + $0x8] sm:$0xff]
  %v16 = vld [vmem:[%s0 + $0x10] sm:$0xff]
  %v17 = vld [vmem:[%s0 + $0x18] sm:$0xff]
  %v18 = vxor.u32 %v14, 2147483648
  %v19 = vxor.u32 %v15, 2147483648
  %v20 = vxor.u32 %v16, 2147483648
  %v21 = vxor.u32 %v17, 2147483648
  %v22 = vmul.f32 %v18, 1.442695
  %v23 = vpow.pop %v22
  %v24 = vmul.f32 %v19, 1.442695
  %v25 = vpow.pop %v24
  %v26 = vmul.f32 %v20, 1.442695
  %v27 = vpow.pop %v26
  %v28 = vmul.f32 %v21, 1.442695
  %v29 = vpow.pop %v28
  %v30 = vadd.f32 %v23, 1.0
  %v31 = vadd.f32 %v25, 1.0
  %v32 = vadd.f32 %v27, 1.0
  %v33 = vadd.f32 %v29, 1.0
  %v34 = vrcp.pop %v30
  %v35 = vmul.f32 1.0, %v34
  %v36 = vrcp.pop %v31
  %v37 = vmul.f32 1.0, %v36
  %v38 = vrcp.pop %v32
  %v39 = vmul.f32 1.0, %v38
  %v40 = vrcp.pop %v33
  %v41 = vmul.f32 1.0, %v40
  %s42 = scalar_lea.vmem %s0, 32
  %v43 = vld [vmem:[%s42] sm:$0xff]
  %v44 = vld [vmem:[%s42 + $0x8] sm:$0xff]
  %v45 = vld [vmem:[%s42 + $0x10] sm:$0xff]
  %v46 = vld [vmem:[%s42 + $0x18] sm:$0xff]
  %v47 = vxor.u32 %v43, 2147483648
  %v48 = vxor.u32 %v44, 2147483648
  %v49 = vxor.u32 %v45, 2147483648
  %v50 = vxor.u32 %v46, 2147483648
  %v51 = vmul.f32 %v47, 1.442695
  %v52 = vpow.pop %v51
  %v53 = vmul.f32 %v48, 1.442695
  %v54 = vpow.pop %v53
  %v55 = vmul.f32 %v49, 1.442695
  %v56 = vpow.pop %v55
  %v57 = vmul.f32 %v50, 1.442695
  %v58 = vpow.pop %v57
  %v59 = vadd.f32 %v52, 1.0
  %v60 = vadd.f32 %v54, 1.0
  %v61 = vadd.f32 %v56, 1.0
  %v62 = vadd.f32 %v58, 1.0
  %v63 = vrcp.pop %v59
  %v64 = vmul.f32 1.0, %v63
  %v65 = vrcp.pop %v60
  %v66 = vmul.f32 1.0, %v65
  %v67 = vrcp.pop %v61
  %v68 = vmul.f32 1.0, %v67
  %v69 = vrcp.pop %v62
  %v70 = vmul.f32 1.0, %v69
  %s71 = scalar_lea.vmem %s0, 64
  %v72 = vld [vmem:[%s71] sm:$0xff]
  %v73 = vld [vmem:[%s71 + $0x8] sm:$0xff]
  %v74 = vld [vmem:[%s71 + $0x10] sm:$0xff]
  %v75 = vld [vmem:[%s71 + $0x18] sm:$0xff]
  %s76 = scalar_lea.vmem %s0, 96
  %v77 = vld [vmem:[%s76] sm:$0xff]
  %v78 = vld [vmem:[%s76 + $0x8] sm:$0xff]
  %v79 = vld [vmem:[%s76 + $0x10] sm:$0xff]
  %v80 = vld [vmem:[%s76 + $0x18] sm:$0xff]
  %v81 = vld [vmem:[%s1] sm:$0xff]
  %v82 = vld [vmem:[%s1 + $0x8] sm:$0xff]
  %v83 = vld [vmem:[%s1 + $0x10] sm:$0xff]
  %v84 = vld [vmem:[%s1 + $0x18] sm:$0xff]
  %v85 = vxor.u32 %v81, 2147483648
  %v86 = vxor.u32 %v82, 2147483648
  %v87 = vxor.u32 %v83, 2147483648
  %v88 = vxor.u32 %v84, 2147483648
  %v89 = vmul.f32 %v85, 1.442695
  %v90 = vpow.pop %v89
  %v91 = vmul.f32 %v86, 1.442695
  %v92 = vpow.pop %v91
  %v93 = vmul.f32 %v87, 1.442695
  %v94 = vpow.pop %v93
  %v95 = vmul.f32 %v88, 1.442695
  %v96 = vpow.pop %v95
  %v97 = vadd.f32 %v90, 1.0
  %v98 = vadd.f32 %v92, 1.0
  %v99 = vadd.f32 %v94, 1.0
  %v100 = vadd.f32 %v96, 1.0
  %v101 = vrcp.pop %v97
  %v102 = vmul.f32 1.0, %v101
  %v103 = vrcp.pop %v98
  %v104 = vmul.f32 1.0, %v103
  %v105 = vrcp.pop %v99
  %v106 = vmul.f32 1.0, %v105
  %v107 = vrcp.pop %v100
  %v108 = vmul.f32 1.0, %v107
  %v109 = vld [vmem:[%s2] sm:$0xff]
  %v110 = vld [vmem:[%s2 + $0x8] sm:$0xff]
  %v111 = vld [vmem:[%s2 + $0x10] sm:$0xff]
  %v112 = vld [vmem:[%s2 + $0x18] sm:$0xff]
  %s113 = scalar_lea.vmem %s2, 32
  %v114 = vld [vmem:[%s113] sm:$0xff]
  %v115 = vld [vmem:[%s113 + $0x8] sm:$0xff]
  %v116 = vld [vmem:[%s113 + $0x10] sm:$0xff]
  %v117 = vld [vmem:[%s113 + $0x18] sm:$0xff]
  %s118 = scalar_lea.vmem %s2, 64
  %v119 = vld [vmem:[%s118] sm:$0xff]
  %v120 = vld [vmem:[%s118 + $0x8] sm:$0xff]
  %v121 = vld [vmem:[%s118 + $0x10] sm:$0xff]
  %v122 = vld [vmem:[%s118 + $0x18] sm:$0xff]
  %s123 = scalar_lea.vmem %s2, 96
  %v124 = vld [vmem:[%s123] sm:$0xff]
  %v125 = vld [vmem:[%s123 + $0x8] sm:$0xff]
  %v126 = vld [vmem:[%s123 + $0x10] sm:$0xff]
  %v127 = vld [vmem:[%s123 + $0x18] sm:$0xff]
  %s128 = scalar_lea.vmem %s2, 128
  %v129 = vld [vmem:[%s128] sm:$0xff]
  %v130 = vld [vmem:[%s128 + $0x8] sm:$0xff]
  %v131 = vld [vmem:[%s128 + $0x10] sm:$0xff]
  %v132 = vld [vmem:[%s128 + $0x18] sm:$0xff]
  %s133 = scalar_lea.vmem %s2, 160
  %v134 = vld [vmem:[%s133] sm:$0xff]
  %v135 = vld [vmem:[%s133 + $0x8] sm:$0xff]
  %v136 = vld [vmem:[%s133 + $0x10] sm:$0xff]
  %v137 = vld [vmem:[%s133 + $0x18] sm:$0xff]
  %s138 = scalar_lea.vmem %s2, 192
  %v139 = vld [vmem:[%s138] sm:$0xff]
  %v140 = vld [vmem:[%s138 + $0x8] sm:$0xff]
  %v141 = vld [vmem:[%s138 + $0x10] sm:$0xff]
  %v142 = vld [vmem:[%s138 + $0x18] sm:$0xff]
  %v143 = vsub.f32 %v35, %v109
  %v144 = vsub.f32 %v37, %v110
  %v145 = vsub.f32 %v39, %v111
  %v146 = vsub.f32 %v41, %v112
  %v147 = vmul.f32 %v143, %v134
  %v148 = vmul.f32 %v144, %v135
  %v149 = vmul.f32 %v145, %v136
  %v150 = vmul.f32 %v146, %v137
  %v151 = vmul.f32 %v147, %v147
  %v152 = vmul.f32 %v148, %v148
  %v153 = vmul.f32 %v149, %v149
  %v154 = vmul.f32 %v150, %v150
  %v155 = vadd.f32 %v151, %v152
  %v156 = vadd.f32 %v155, %v153
  %v157 = vadd.f32 %v156, %v154
  %158 = vadd.xlane.f32.xlu0 %v157
  %v159 = vpop.xlane.xlu0 %158
  %v160 = vrot.slane %v159, 4
  %v161 = vadd.f32 %v159, %v160
  %v162 = vrot.slane %v161, 2
  %v163 = vadd.f32 %v161, %v162
  %v164 = vrot.slane %v163, 1
  %v165 = vadd.f32 %v163, %v164
  %s166 = vtos %v165
  %s167 = smul.f32 %s166, 0.5
  %v168 = vsub.f32 %v64, %v114
  %v169 = vsub.f32 %v66, %v115
  %v170 = vsub.f32 %v68, %v116
  %v171 = vsub.f32 %v70, %v117
  %v172 = vmul.f32 %v168, %v134
  %v173 = vmul.f32 %v169, %v135
  %v174 = vmul.f32 %v170, %v136
  %v175 = vmul.f32 %v171, %v137
  %v176 = vmul.f32 %v172, %v172
  %v177 = vmul.f32 %v173, %v173
  %v178 = vmul.f32 %v174, %v174
  %v179 = vmul.f32 %v175, %v175
  %v180 = vadd.f32 %v176, %v177
  %v181 = vadd.f32 %v180, %v178
  %v182 = vadd.f32 %v181, %v179
  %183 = vadd.xlane.f32.xlu0 %v182
  %v184 = vpop.xlane.xlu0 %183
  %v185 = vrot.slane %v184, 4
  %v186 = vadd.f32 %v184, %v185
  %v187 = vrot.slane %v186, 2
  %v188 = vadd.f32 %v186, %v187
  %v189 = vrot.slane %v188, 1
  %v190 = vadd.f32 %v188, %v189
  %s191 = vtos %v190
  %s192 = smul.f32 %s191, 0.5
  %v193 = vsub.f32 %v72, %v119
  %v194 = vsub.f32 %v73, %v120
  %v195 = vsub.f32 %v74, %v121
  %v196 = vsub.f32 %v75, %v122
  %v197 = vmul.f32 %v193, %v134
  %v198 = vmul.f32 %v194, %v135
  %v199 = vmul.f32 %v195, %v136
  %v200 = vmul.f32 %v196, %v137
  %v201 = vmul.f32 %v197, %v197
  %v202 = vmul.f32 %v198, %v198
  %v203 = vmul.f32 %v199, %v199
  %v204 = vmul.f32 %v200, %v200
  %v205 = vadd.f32 %v201, %v202
  %v206 = vadd.f32 %v205, %v203
  %v207 = vadd.f32 %v206, %v204
  %208 = vadd.xlane.f32.xlu0 %v207
  %v209 = vpop.xlane.xlu0 %208
  %v210 = vrot.slane %v209, 4
  %v211 = vadd.f32 %v209, %v210
  %v212 = vrot.slane %v211, 2
  %v213 = vadd.f32 %v211, %v212
  %v214 = vrot.slane %v213, 1
  %v215 = vadd.f32 %v213, %v214
  %s216 = vtos %v215
  %s217 = smul.f32 %s216, 0.5
  %v218 = vsub.f32 %v77, %v124
  %v219 = vsub.f32 %v78, %v125
  %v220 = vsub.f32 %v79, %v126
  %v221 = vsub.f32 %v80, %v127
  %v222 = vmul.f32 %v218, %v134
  %v223 = vmul.f32 %v219, %v135
  %v224 = vmul.f32 %v220, %v136
  %v225 = vmul.f32 %v221, %v137
  %v226 = vmul.f32 %v222, %v222
  %v227 = vmul.f32 %v223, %v223
  %v228 = vmul.f32 %v224, %v224
  %v229 = vmul.f32 %v225, %v225
  %v230 = vadd.f32 %v226, %v227
  %v231 = vadd.f32 %v230, %v228
  %v232 = vadd.f32 %v231, %v229
  %233 = vadd.xlane.f32.xlu0 %v232
  %v234 = vpop.xlane.xlu0 %233
  %v235 = vrot.slane %v234, 4
  %v236 = vadd.f32 %v234, %v235
  %v237 = vrot.slane %v236, 2
  %v238 = vadd.f32 %v236, %v237
  %v239 = vrot.slane %v238, 1
  %v240 = vadd.f32 %v238, %v239
  %s241 = vtos %v240
  %s242 = smul.f32 %s241, 0.5
  %v243 = vsub.f32 %v102, %v129
  %v244 = vsub.f32 %v104, %v130
  %v245 = vsub.f32 %v106, %v131
  %v246 = vsub.f32 %v108, %v132
  %v247 = vmul.f32 %v139, %v243
  %v248 = vmul.f32 %v140, %v244
  %v249 = vmul.f32 %v141, %v245
  %v250 = vmul.f32 %v142, %v246
  %v251 = vmul.f32 %v247, %v243
  %v252 = vmul.f32 %v248, %v244
  %v253 = vmul.f32 %v249, %v245
  %v254 = vmul.f32 %v250, %v246
  %v255 = vadd.f32 %v251, %v252
  %v256 = vadd.f32 %v255, %v253
  %v257 = vadd.f32 %v256, %v254
  %258 = vadd.xlane.f32.xlu0 %v257
  %v259 = vpop.xlane.xlu0 %258
  %v260 = vrot.slane %v259, 4
  %v261 = vadd.f32 %v259, %v260
  %v262 = vrot.slane %v261, 2
  %v263 = vadd.f32 %v261, %v262
  %v264 = vrot.slane %v263, 1
  %v265 = vadd.f32 %v263, %v264
  %s266 = vtos %v265
  %s267 = smul.f32 %s266, 0.5
  %s268 = sadd.f32 %s167, %s192
  %s269 = sadd.f32 %s268, %s217
  %s270 = sadd.f32 %s269, %s242
  %s271 = sadd.f32 %s270, %s267
  %v272 = vstv %s271
  %273 = vst [vmem:[%s3] sm:$0x1] %v272
  // Predicated region
  $region14: #{region_loss_forward.3} parent=0 // pred_check
    _
  $region15: #{region_loss_forward.3} parent=0 // pred_check_branch
    %275 = sbr.rel (0) target = $region17
  $region16: #{region_loss_forward.3} parent=0 // pred_region
    _
  $region17: #{region_loss_forward.3} parent=0 // pred_fallthru
    _
  // Predicated region
  $region18: #{region_loss_forward.3} parent=0 // pred_check
    _
  $region19: #{region_loss_forward.3} parent=0 // pred_check_branch
    %277 = sbr.rel (0) target = $region21
  $region20: #{region_loss_forward.3} parent=0 // pred_region
    _
  $region21: #{region_loss_forward.3} parent=0 // pred_fallthru
    _

</llo_original>
